<compile_context>
chip_gen: v7x
topology: tpu7x:2x2x1
jax: 0.10.0
libtpu: 0.0.40
codegen_flags: <defaults>
</compile_context>

<pallas_src>
import functools

import jax
import jax.numpy as jnp
from jax.experimental import pallas as pl
from jax.experimental.pallas import tpu as pltpu

STATE_IN = 392
ACTION_IN = 9
STATE_REP = STATE_IN // 2        # 196
ACTION_REP = ACTION_IN // 2      # 4
HIDDEN = 64
ACTION_REP_PAD = 8               # action_rep output padded 4 -> 8 (zeros inert)

# Default batch tile.  With the explicit vmem_limit below, 2048 is safe on
# v5e/v6e/v7x in both f32 and bf16 input paths (v5e users chasing VMEM headroom
# for co-resident kernels can drop block_b to 1024).
DEFAULT_BLOCK_B = 2048


def _round_up(x, m):
    return ((x + m - 1) // m) * m


def _disc_kernel(state_ref, action_ref,
                 ws_ref, bs_ref,            # state_rep : (392,196), (1,196)
                 wa_ref, ba_ref,            # action_rep: (9,8),     (1,8)  N zero-padded
                 w1s_ref, w1a_ref, b1_ref,  # hidden    : (196,64), (8,64), (1,64)
                 w2_ref, b2_ref,            # out       : (1,64), (1,1)
                 out_ref):                  # (1, 1, tb) lane-dense output block
    mm_dtype = ws_ref.dtype
    # Cast activations to the matmul dtype *inside* the kernel — no extra
    # wrapper-side HBM convert pass on the dominant (B, 392) stream.
    s = state_ref[...].astype(mm_dtype)
    a = action_ref[...].astype(mm_dtype)

    # state_rep / action_rep linears (MXU, f32 accumulation) + ReLU.
    s1 = jnp.dot(s, ws_ref[...], preferred_element_type=jnp.float32) + bs_ref[...]
    a1 = jnp.dot(a, wa_ref[...], preferred_element_type=jnp.float32) + ba_ref[...]
    s1 = jnp.maximum(s1, 0.0)
    a1 = jnp.maximum(a1, 0.0)
    # Dropout(0.3) is identity in eval mode.

    # Linear(200 -> 64) as two matmuls over the split weight blocks (no concat).
    h = (jnp.dot(s1.astype(w1s_ref.dtype), w1s_ref[...],
                 preferred_element_type=jnp.float32)
         + jnp.dot(a1.astype(w1a_ref.dtype), w1a_ref[...],
                   preferred_element_type=jnp.float32)
         + b1_ref[...])
    h = jnp.maximum(h, 0.0)

    # Linear(64 -> 1) on the VPU/XLU: multiply by the weight row and reduce over
    # lanes (an MXU pass with N=1 would waste 255/256 of the array).
    logits = jnp.sum(h * w2_ref[...], axis=-1, keepdims=True) + b2_ref[...]   # (tb, 1)
    v = jnp.clip(jax.nn.sigmoid(logits), 1e-6, 1.0 - 1e-6)

    # Lane-dense store: relayout the (tb,1) column into a (1,1,tb) row (XLU has
    # slack here) so the per-tile writeback DMA is one contiguous tb*4B strip
    # instead of tb single-lane strips.
    out_ref[...] = v.reshape(1, 1, -1)


def prepare_params(params, compute_dtype=jnp.float32):
    """One-time weight prep: transpose, split the concat, zero-pad, cast.

    Matmul operands are cast to `compute_dtype` (f32 or bf16); biases and the
    final 64->1 weight row stay f32 (elementwise math is always f32)."""
    ws_t = params["ws"].T.astype(compute_dtype)                       # (392, 196)

    wa_t = jnp.zeros((ACTION_IN, ACTION_REP_PAD), compute_dtype)      # (9, 8)
    wa_t = wa_t.at[:, :ACTION_REP].set(params["wa"].T.astype(compute_dtype))
    ba = jnp.zeros((1, ACTION_REP_PAD), jnp.float32)                  # (1, 8)
    ba = ba.at[0, :ACTION_REP].set(params["ba"].astype(jnp.float32))

    w1_t = params["w1"].T                                             # (200, 64)
    w1s = w1_t[:STATE_REP, :].astype(compute_dtype)                   # (196, 64)
    w1a = jnp.zeros((ACTION_REP_PAD, HIDDEN), compute_dtype)          # (8, 64)
    w1a = w1a.at[:ACTION_REP, :].set(w1_t[STATE_REP:, :].astype(compute_dtype))

    return {
        "ws_t": ws_t,
        "bs": params["bs"].reshape(1, -1).astype(jnp.float32),        # (1, 196)
        "wa_t": wa_t,
        "ba": ba,
        "w1s": w1s,
        "w1a": w1a,
        "b1": params["b1"].reshape(1, -1).astype(jnp.float32),        # (1, 64)
        "w2_row": params["w2"].reshape(1, -1).astype(jnp.float32),    # (1, 64)
        "b2": params["b2"].reshape(1, 1).astype(jnp.float32),         # (1, 1)
    }


def _vmem_limit_bytes(tb, state_itemsize, action_itemsize):
    """Explicit scoped-VMEM budget from the actual lane-padded tile shapes."""
    lane, sub = 128, 8

    def tile_bytes(rows, cols, itemsize):
        return _round_up(rows, sub) * _round_up(cols, lane) * itemsize

    streamed = 2 * (tile_bytes(tb, STATE_IN, state_itemsize)          # double-buffered
                    + tile_bytes(tb, ACTION_IN, action_itemsize)
                    + tile_bytes(1, tb, 4))
    weights = 1 << 20                                                 # f32 upper bound
    interm = _round_up(tb, sub) * (256 + 128 + 128 + 128) * 4         # s1, a1, h, temps
    est = streamed + weights + interm
    # Generous headroom, clamped to stay under v7x's 64 MiB physical VMEM while
    # explicitly exceeding the 16/32 MiB scoped defaults of v5e/v6e/v7x.
    return int(min(max(2 * est, 32 << 20), 56 << 20))


@functools.partial(jax.jit, static_argnames=("block_b",))
def discriminator_forward(state, action, prepared, *, block_b=DEFAULT_BLOCK_B):
    """state: (B, 392), action: (B, 9) -> (B, 1) f32 validity.

    Inputs are streamed in whatever dtype the caller provides (f32 or bf16) and
    cast to the weight compute dtype inside the kernel.  Pass bf16 activations
    together with bf16-prepared weights to actually halve HBM traffic on the
    dominant (B, 392) state stream."""
    B = state.shape[0]
    assert state.shape == (B, STATE_IN) and action.shape == (B, ACTION_IN)

    # Batch tile: aim for >= 8 grid steps on large batches (pipeline overlap and
    # a balanced megacore split), keep rows a multiple of 8, cap at block_b.
    tb = min(block_b, max(128, _round_up(pl.cdiv(B, 8), 128)))
    tb = min(tb, _round_up(B, 8))
    nb = pl.cdiv(B, tb)

    args = (state, action,
            prepared["ws_t"], prepared["bs"],
            prepared["wa_t"], prepared["ba"],
            prepared["w1s"], prepared["w1a"], prepared["b1"],
            prepared["w2_row"], prepared["b2"])

    # Weights/biases: constant index_map -> fetched once, VMEM-resident across
    # all grid steps.  (pipeline_mode=pl.Buffered(1) would single-buffer them and
    # save ~0.5 MiB more; omitted for maximum lowering portability.)
    in_specs = [
        pl.BlockSpec((tb, STATE_IN), lambda i: (i, 0)),
        pl.BlockSpec((tb, ACTION_IN), lambda i: (i, 0)),
    ] + [pl.BlockSpec(a.shape, lambda i: (0, 0)) for a in args[2:]]

    grid_spec = pltpu.PrefetchScalarGridSpec(
        num_scalar_prefetch=0,
        grid=(nb,),
        in_specs=in_specs,
        out_specs=pl.BlockSpec((1, 1, tb), lambda i: (i, 0, 0)),
    )

    out = pl.pallas_call(
        _disc_kernel,
        out_shape=jax.ShapeDtypeStruct((nb, 1, tb), jnp.float32),
        grid_spec=grid_spec,
        compiler_params=pltpu.CompilerParams(
            dimension_semantics=("parallel",),       # v7x: shard batch over 2 TCs
            vmem_limit_bytes=_vmem_limit_bytes(
                tb, state.dtype.itemsize, action.dtype.itemsize)),
    )(*args)

    # Lane-dense (nb, 1, tb) slab -> (B, 1); padded tail rows are discarded.
    return out.reshape(nb * tb, 1)[:B]


def init_params(key):
    """Deterministic parameter init matching the PyTorch module's shapes.

    PyTorch nn.Linear stores weight as (out_features, in_features)."""
    ks = jax.random.split(key, 8)

    def uniform(k, shape, fan_in):
        bound = 1.0 / jnp.sqrt(float(fan_in))
        return jax.random.uniform(k, shape, jnp.float32, -bound, bound)

    return {
        "ws": uniform(ks[0], (STATE_REP, STATE_IN), STATE_IN),
        "bs": uniform(ks[1], (STATE_REP,), STATE_IN),
        "wa": uniform(ks[2], (ACTION_REP, ACTION_IN), ACTION_IN),
        "ba": uniform(ks[3], (ACTION_REP,), ACTION_IN),
        "w1": uniform(ks[4], (HIDDEN, STATE_REP + ACTION_REP), STATE_REP + ACTION_REP),
        "b1": uniform(ks[5], (HIDDEN,), STATE_REP + ACTION_REP),
        "w2": uniform(ks[6], (1, HIDDEN), HIDDEN),
        "b2": uniform(ks[7], (1,), HIDDEN),
    }


def reference_forward(state, action, params):
    """Pure-JAX reference for validation."""
    s1 = state @ params["ws"].T + params["bs"]
    a1 = action @ params["wa"].T + params["ba"]
    x = jnp.concatenate([s1, a1], axis=1)
    h = jnp.maximum(x, 0.0) @ params["w1"].T + params["b1"]
    h = jnp.maximum(h, 0.0)
    v = jax.nn.sigmoid(h @ params["w2"].T + params["b2"])
    return jnp.clip(v, 1e-6, 1.0 - 1e-6)


if __name__ == "__main__":
    key = jax.random.PRNGKey(0)
    k_params, k_data = jax.random.split(key)
    params = init_params(k_params)

    prep_f32 = prepare_params(params, jnp.float32)
    prep_bf16 = prepare_params(params, jnp.bfloat16)

    # Small single-tile case + multi-tile case with a ragged last tile
    # (300 = 128 + 128 + 44) to exercise the pipelined grid.
    for B in (8, 300):
        k_s, k_a, k_data = jax.random.split(k_data, 3)
        state = jax.random.normal(k_s, (B, STATE_IN), jnp.float32)
        action = jax.random.normal(k_a, (B, ACTION_IN), jnp.float32)
        ref = reference_forward(state, action, params)

        # f32 path: matches the f32 reference to float tolerance.
        out = jax.block_until_ready(discriminator_forward(state, action, prep_f32))
        assert out.shape == (B, 1)
        assert jnp.allclose(out, ref, atol=1e-5, rtol=1e-5), (
            "f32 mismatch", float(jnp.max(jnp.abs(out - ref))))

        # bf16 weights with f32 inputs: cast happens inside the kernel.
        out_mixed = jax.block_until_ready(
            discriminator_forward(state, action, prep_bf16))
        assert out_mixed.shape == (B, 1)
        assert jnp.allclose(out_mixed, ref, atol=5e-2), (
            "bf16-weight mismatch", float(jnp.max(jnp.abs(out_mixed - ref))))

        # Fully-bf16 fast path: the caller supplies bf16 activations, which is
        # where the 2x HBM-traffic cut on the (B, 392) stream is realized.
        out_bf16 = jax.block_until_ready(
            discriminator_forward(state.astype(jnp.bfloat16),
                                  action.astype(jnp.bfloat16), prep_bf16))
        assert out_bf16.shape == (B, 1)
        assert jnp.allclose(out_bf16, ref, atol=5e-2), (
            "bf16 mismatch", float(jnp.max(jnp.abs(out_bf16 - ref))))

    # Extra multi-step pipelined config (5 tiles of 64, ragged last tile).
    B = 300
    k_s, k_a, _ = jax.random.split(k_data, 3)
    state = jax.random.normal(k_s, (B, STATE_IN), jnp.float32)
    action = jax.random.normal(k_a, (B, ACTION_IN), jnp.float32)
    ref = reference_forward(state, action, params)
    out = jax.block_until_ready(
        discriminator_forward(state, action, prep_f32, block_b=64))
    assert out.shape == (B, 1)
    assert jnp.allclose(out, ref, atol=1e-5, rtol=1e-5), (
        "f32 (block_b=64) mismatch", float(jnp.max(jnp.abs(out - ref))))

    print("KERNEL_OK")
</pallas_src>

<mosaic_0001>
module attributes {stable_mosaic.version = 11 : i64} {
  func.func @_disc_kernel(%arg0: i32, %arg1: memref<8x392xf32, #tpu.memory_space<vmem>>, %arg2: memref<8x9xf32, #tpu.memory_space<vmem>>, %arg3: memref<392x196xf32, #tpu.memory_space<vmem>>, %arg4: memref<1x196xf32, #tpu.memory_space<vmem>>, %arg5: memref<9x8xf32, #tpu.memory_space<vmem>>, %arg6: memref<1x8xf32, #tpu.memory_space<vmem>>, %arg7: memref<196x64xf32, #tpu.memory_space<vmem>>, %arg8: memref<8x64xf32, #tpu.memory_space<vmem>>, %arg9: memref<1x64xf32, #tpu.memory_space<vmem>>, %arg10: memref<1x64xf32, #tpu.memory_space<vmem>>, %arg11: memref<1x1xf32, #tpu.memory_space<vmem>>, %arg12: memref<1x1x8xf32, #tpu.memory_space<vmem>>) attributes {dimension_semantics = [#tpu.dimension_semantics<parallel>], iteration_bounds = array<i64: 1>, scalar_prefetch = 0 : i64, scratch_operands = 0 : i64, tpu.core_type = #tpu.core_type<tc>, window_params = [{transform_indices = @transform_0, window_bounds = array<i64: 8, 392>}, {transform_indices = @transform_1, window_bounds = array<i64: 8, 9>}, {pipeline_mode = #tpu.pipeline_mode<synchronous>, transform_indices = @transform_2, window_bounds = array<i64: 392, 196>}, {pipeline_mode = #tpu.pipeline_mode<synchronous>, transform_indices = @transform_3, window_bounds = array<i64: 1, 196>}, {pipeline_mode = #tpu.pipeline_mode<synchronous>, transform_indices = @transform_4, window_bounds = array<i64: 9, 8>}, {pipeline_mode = #tpu.pipeline_mode<synchronous>, transform_indices = @transform_5, window_bounds = array<i64: 1, 8>}, {pipeline_mode = #tpu.pipeline_mode<synchronous>, transform_indices = @transform_6, window_bounds = array<i64: 196, 64>}, {pipeline_mode = #tpu.pipeline_mode<synchronous>, transform_indices = @transform_7, window_bounds = array<i64: 8, 64>}, {pipeline_mode = #tpu.pipeline_mode<synchronous>, transform_indices = @transform_8, window_bounds = array<i64: 1, 64>}, {pipeline_mode = #tpu.pipeline_mode<synchronous>, transform_indices = @transform_9, window_bounds = array<i64: 1, 64>}, {pipeline_mode = #tpu.pipeline_mode<synchronous>, transform_indices = @transform_10, window_bounds = array<i64: 1, 1>}, {transform_indices = @transform_11, window_bounds = array<i64: 1, 1, 8>}]} {
    %c0 = arith.constant 0 : index
    %c0_0 = arith.constant 0 : index
    %0 = vector.load %arg1[%c0, %c0_0] : memref<8x392xf32, #tpu.memory_space<vmem>>, vector<8x392xf32>
    %c0_1 = arith.constant 0 : index
    %c0_2 = arith.constant 0 : index
    %1 = vector.load %arg2[%c0_1, %c0_2] : memref<8x9xf32, #tpu.memory_space<vmem>>, vector<8x9xf32>
    %c0_3 = arith.constant 0 : index
    %c0_4 = arith.constant 0 : index
    %2 = vector.load %arg3[%c0_3, %c0_4] : memref<392x196xf32, #tpu.memory_space<vmem>>, vector<392x196xf32>
    %cst = arith.constant dense<0.000000e+00> : vector<8x196xf32>
    %3 = tpu.matmul %0, %2, %cst {dimension_numbers = #tpu.dot_dimension_numbers<[1], [0], [0], [1], [0, 0, 1, 1], [], []>} : vector<8x392xf32>, vector<392x196xf32>, vector<8x196xf32> -> vector<8x196xf32>
    %c0_5 = arith.constant 0 : index
    %c0_6 = arith.constant 0 : index
    %4 = vector.load %arg4[%c0_5, %c0_6] : memref<1x196xf32, #tpu.memory_space<vmem>>, vector<1x196xf32>
    %5 = vector.broadcast %4 : vector<1x196xf32> to vector<8x196xf32>
    %6 = arith.addf %3, %5 : vector<8x196xf32>
    %c0_7 = arith.constant 0 : index
    %c0_8 = arith.constant 0 : index
    %7 = vector.load %arg5[%c0_7, %c0_8] : memref<9x8xf32, #tpu.memory_space<vmem>>, vector<9x8xf32>
    %cst_9 = arith.constant dense<0.000000e+00> : vector<8x8xf32>
    %8 = tpu.matmul %1, %7, %cst_9 {dimension_numbers = #tpu.dot_dimension_numbers<[1], [0], [0], [1], [0, 0, 1, 1], [], []>} : vector<8x9xf32>, vector<9x8xf32>, vector<8x8xf32> -> vector<8x8xf32>
    %c0_10 = arith.constant 0 : index
    %c0_11 = arith.constant 0 : index
    %9 = vector.load %arg6[%c0_10, %c0_11] : memref<1x8xf32, #tpu.memory_space<vmem>>, vector<1x8xf32>
    %10 = vector.broadcast %9 : vector<1x8xf32> to vector<8x8xf32>
    %11 = arith.addf %8, %10 : vector<8x8xf32>
    %cst_12 = arith.constant 0.000000e+00 : f32
    %12 = vector.broadcast %cst_12 : f32 to vector<8x196xf32>
    %13 = arith.maximumf %6, %12 : vector<8x196xf32>
    %cst_13 = arith.constant 0.000000e+00 : f32
    %14 = vector.broadcast %cst_13 : f32 to vector<8x8xf32>
    %15 = arith.maximumf %11, %14 : vector<8x8xf32>
    %c0_14 = arith.constant 0 : index
    %c0_15 = arith.constant 0 : index
    %16 = vector.load %arg7[%c0_14, %c0_15] : memref<196x64xf32, #tpu.memory_space<vmem>>, vector<196x64xf32>
    %cst_16 = arith.constant dense<0.000000e+00> : vector<8x64xf32>
    %17 = tpu.matmul %13, %16, %cst_16 {dimension_numbers = #tpu.dot_dimension_numbers<[1], [0], [0], [1], [0, 0, 1, 1], [], []>} : vector<8x196xf32>, vector<196x64xf32>, vector<8x64xf32> -> vector<8x64xf32>
    %c0_17 = arith.constant 0 : index
    %c0_18 = arith.constant 0 : index
    %18 = vector.load %arg8[%c0_17, %c0_18] : memref<8x64xf32, #tpu.memory_space<vmem>>, vector<8x64xf32>
    %cst_19 = arith.constant dense<0.000000e+00> : vector<8x64xf32>
    %19 = tpu.matmul %15, %18, %cst_19 {dimension_numbers = #tpu.dot_dimension_numbers<[1], [0], [0], [1], [0, 0, 1, 1], [], []>} : vector<8x8xf32>, vector<8x64xf32>, vector<8x64xf32> -> vector<8x64xf32>
    %20 = arith.addf %17, %19 : vector<8x64xf32>
    %c0_20 = arith.constant 0 : index
    %c0_21 = arith.constant 0 : index
    %21 = vector.load %arg9[%c0_20, %c0_21] : memref<1x64xf32, #tpu.memory_space<vmem>>, vector<1x64xf32>
    %22 = vector.broadcast %21 : vector<1x64xf32> to vector<8x64xf32>
    %23 = arith.addf %20, %22 : vector<8x64xf32>
    %cst_22 = arith.constant 0.000000e+00 : f32
    %24 = vector.broadcast %cst_22 : f32 to vector<8x64xf32>
    %25 = arith.maximumf %23, %24 : vector<8x64xf32>
    %c0_23 = arith.constant 0 : index
    %c0_24 = arith.constant 0 : index
    %26 = vector.load %arg10[%c0_23, %c0_24] : memref<1x64xf32, #tpu.memory_space<vmem>>, vector<1x64xf32>
    %27 = vector.broadcast %26 : vector<1x64xf32> to vector<8x64xf32>
    %28 = arith.mulf %25, %27 : vector<8x64xf32>
    %cst_25 = arith.constant dense<0.000000e+00> : vector<8xf32>
    %29 = vector.multi_reduction <add>, %28, %cst_25 [1] : vector<8x64xf32> to vector<8xf32>
    %30 = vector.shape_cast %29 : vector<8xf32> to vector<8x1xf32>
    %c0_26 = arith.constant 0 : index
    %c0_27 = arith.constant 0 : index
    %31 = vector.load %arg11[%c0_26, %c0_27] : memref<1x1xf32, #tpu.memory_space<vmem>>, vector<1x1xf32>
    %32 = vector.broadcast %31 : vector<1x1xf32> to vector<8x1xf32>
    %33 = arith.addf %30, %32 : vector<8x1xf32>
    %34 = arith.negf %33 : vector<8x1xf32>
    %35 = math.exp %34 : vector<8x1xf32>
    %cst_28 = arith.constant 1.000000e+00 : f32
    %36 = vector.broadcast %cst_28 : f32 to vector<8x1xf32>
    %37 = arith.addf %36, %35 : vector<8x1xf32>
    %38 = arith.divf %36, %37 : vector<8x1xf32>
    %cst_29 = arith.constant 9.99999997E-7 : f32
    %cst_30 = arith.constant 0.999998986 : f32
    %39 = vector.broadcast %cst_29 : f32 to vector<8x1xf32>
    %40 = arith.maximumf %39, %38 : vector<8x1xf32>
    %41 = vector.broadcast %cst_30 : f32 to vector<8x1xf32>
    %42 = arith.minimumf %41, %40 : vector<8x1xf32>
    %43 = vector.shape_cast %42 : vector<8x1xf32> to vector<1x1x8xf32>
    %c0_31 = arith.constant 0 : index
    %c0_32 = arith.constant 0 : index
    %c0_33 = arith.constant 0 : index
    %44 = vector.load %arg12[%c0_31, %c0_32, %c0_33] : memref<1x1x8xf32, #tpu.memory_space<vmem>>, vector<1x1x8xf32>
    tpu.vector_store %arg12[%c0_31, %c0_32, %c0_33], %43 {strides = array<i32>} : memref<1x1x8xf32, #tpu.memory_space<vmem>>, vector<1x1x8xf32>,
    return
  }
  func.func @transform_0(%arg0: i32) -> (i32, i32) {
    %c0_i32 = arith.constant 0 : i32
    %c0_i32_0 = arith.constant 0 : i32
    return %arg0, %c0_i32 : i32, i32
  }
  func.func @transform_1(%arg0: i32) -> (i32, i32) {
    %c0_i32 = arith.constant 0 : i32
    %c0_i32_0 = arith.constant 0 : i32
    return %arg0, %c0_i32 : i32, i32
  }
  func.func @transform_2(%arg0: i32) -> (i32, i32) {
    %c0_i32 = arith.constant 0 : i32
    %c0_i32_0 = arith.constant 0 : i32
    %c0_i32_1 = arith.constant 0 : i32
    return %c0_i32, %c0_i32_0 : i32, i32
  }
  func.func @transform_3(%arg0: i32) -> (i32, i32) {
    %c0_i32 = arith.constant 0 : i32
    %c0_i32_0 = arith.constant 0 : i32
    %c0_i32_1 = arith.constant 0 : i32
    return %c0_i32, %c0_i32_0 : i32, i32
  }
  func.func @transform_4(%arg0: i32) -> (i32, i32) {
    %c0_i32 = arith.constant 0 : i32
    %c0_i32_0 = arith.constant 0 : i32
    %c0_i32_1 = arith.constant 0 : i32
    return %c0_i32, %c0_i32_0 : i32, i32
  }
  func.func @transform_5(%arg0: i32) -> (i32, i32) {
    %c0_i32 = arith.constant 0 : i32
    %c0_i32_0 = arith.constant 0 : i32
    %c0_i32_1 = arith.constant 0 : i32
    return %c0_i32, %c0_i32_0 : i32, i32
  }
  func.func @transform_6(%arg0: i32) -> (i32, i32) {
    %c0_i32 = arith.constant 0 : i32
    %c0_i32_0 = arith.constant 0 : i32
    %c0_i32_1 = arith.constant 0 : i32
    return %c0_i32, %c0_i32_0 : i32, i32
  }
  func.func @transform_7(%arg0: i32) -> (i32, i32) {
    %c0_i32 = arith.constant 0 : i32
    %c0_i32_0 = arith.constant 0 : i32
    %c0_i32_1 = arith.constant 0 : i32
    return %c0_i32, %c0_i32_0 : i32, i32
  }
  func.func @transform_8(%arg0: i32) -> (i32, i32) {
    %c0_i32 = arith.constant 0 : i32
    %c0_i32_0 = arith.constant 0 : i32
    %c0_i32_1 = arith.constant 0 : i32
    return %c0_i32, %c0_i32_0 : i32, i32
  }
  func.func @transform_9(%arg0: i32) -> (i32, i32) {
    %c0_i32 = arith.constant 0 : i32
    %c0_i32_0 = arith.constant 0 : i32
    %c0_i32_1 = arith.constant 0 : i32
    return %c0_i32, %c0_i32_0 : i32, i32
  }
  func.func @transform_10(%arg0: i32) -> (i32, i32) {
    %c0_i32 = arith.constant 0 : i32
    %c0_i32_0 = arith.constant 0 : i32
    %c0_i32_1 = arith.constant 0 : i32
    return %c0_i32, %c0_i32_0 : i32, i32
  }
  func.func @transform_11(%arg0: i32) -> (i32, i32, i32) {
    %c0_i32 = arith.constant 0 : i32
    %c0_i32_0 = arith.constant 0 : i32
    %c0_i32_1 = arith.constant 0 : i32
    return %arg0, %c0_i32, %c0_i32_0 : i32, i32, i32
  }
}

</mosaic_0001>

<llo_original>
// kernel: discriminator_forward.1
$region0: #{discriminator_forward.1}
  #allocation0 [shape = 'u32[]', space=smem, size = 0x4, offset = 0x4, fixed_abs, tag = 'smem constant byte address 0x4 - core index']
  #allocation1 [shape = 'u32[144,128]{1,0:T(1,128)}', space=vmem, size = 0x12000, scoped, tag = 'internal scratch']
  #allocation2 [shape = 'f32[1,1]{1,0:T(1,128)S(1)}', space=vmem, size = 0x200, scoped, tag = 'scoped memory for discriminator_forward.1']
  %s0 = inlined_call_operand.vmem [shape: f32[8,392], index: 0, kind: input, shape index: {}]
  %s1 = inlined_call_operand.vmem [shape: f32[8,9], index: 1, kind: input, shape index: {}]
  %s2 = inlined_call_operand.hbm [shape: f32[392,196], index: 2, kind: input, shape index: {}]
  %s3 = inlined_call_operand.vmem [shape: f32[1,196], index: 3, kind: input, shape index: {}]
  %s4 = inlined_call_operand.vmem [shape: f32[9,8], index: 4, kind: input, shape index: {}]
  %s5 = inlined_call_operand.vmem [shape: f32[1,8], index: 5, kind: input, shape index: {}]
  %s6 = inlined_call_operand.vmem [shape: f32[196,64], index: 6, kind: input, shape index: {}]
  %s7 = inlined_call_operand.vmem [shape: f32[8,64], index: 7, kind: input, shape index: {}]
  %s8 = inlined_call_operand.vmem [shape: f32[1,64], index: 8, kind: input, shape index: {}]
  %s9 = inlined_call_operand.vmem [shape: f32[1,64], index: 9, kind: input, shape index: {}]
  %s10 = inlined_call_operand.<no memory space> [shape: f32[1,1], index: 10, kind: input, shape index: {}]
  %s11 = inlined_call_operand.hbm [shape: f32[1,1,8], index: 11, kind: output, shape index: {}]
  %s12 = sld [smem:[#allocation0]]
  $region58: #{discriminator_forward.1} parent=0
    _
  %s14 = ssub.s32 1, %s12
  %s15 = scalar_select 0, %s14, %s12
  %v16 = vstv %s10
  %17 = vst [vmem:[#allocation2] sm:$0x1] %v16
  $region1: #{discriminator_forward.1} parent=0
    #allocation3 [shape = 'u8[401408]{0}', space=vmem, size = 0x62000, scoped, tag = 'input window, operand 2, single buffered']
    #allocation4 [shape = 's32[1]{0}', space=sflag, size = 0x4, scoped, tag = 'scoped memory for discriminator_forward.1']
    #allocation5 [shape = 's32[1]{0}', space=sflag, size = 0x4, scoped, tag = 'scoped memory for discriminator_forward.1']
    #allocation6 [shape = 'u8[512]{0}', space=vmem, size = 0x400, scoped, tag = 'output window, operand 0, single buffered']
    %18 = vsyncpa [#allocation4], 0
    %19 = vsyncpa [#allocation5], 0
    // Predicated region
    $region2: #{discriminator_forward.1} parent=1 // pred_check
      _
    $region3: #{discriminator_forward.1} parent=1 // pred_check_branch
      %21 = sbr.rel (0) target = $region5
    $region4: #{discriminator_forward.1} parent=1 // pred_region
      _
    $region5: #{discriminator_forward.1} parent=1 // pred_fallthru
      _
    // Predicated region
    $region6: #{discriminator_forward.1} parent=1 // pred_check
      _
    $region7: #{discriminator_forward.1} parent=1 // pred_check_branch
      %23 = sbr.rel (0) target = $region9
    $region8: #{discriminator_forward.1} parent=1 // pred_region
      _
    $region9: #{discriminator_forward.1} parent=1 // pred_fallthru
      _
    // Predicated region
    $region10: #{discriminator_forward.1} parent=1 // pred_check
      _
    $region11: #{discriminator_forward.1} parent=1 // pred_check_branch
      %25 = sbr.rel (0) target = $region13
    $region12: #{discriminator_forward.1} parent=1 // pred_region
      %s27 = ssub.s32 12544, 12544
      %28 = vsyncadd [#allocation4], %s27
      %s29 = sshll.u32 [#allocation3], 4
      %s30 = int_to_ptr.vmem [resolvable:$true] %s29
      %35 = dma.hbm_to_vmem [thread:$0]  %s2, 12544, %s30, [#allocation4], 256, 256, 16
    $region13: #{discriminator_forward.1} parent=1 // pred_fallthru
      _
    // Predicated region
    $region14: #{discriminator_forward.1} parent=1 // pred_check
      _
    $region15: #{discriminator_forward.1} parent=1 // pred_check_branch
      %37 = sbr.rel (0) target = $region17
    $region16: #{discriminator_forward.1} parent=1 // pred_region
      _
    $region17: #{discriminator_forward.1} parent=1 // pred_fallthru
      _
    // Predicated region
    $region18: #{discriminator_forward.1} parent=1 // pred_check
      _
    $region19: #{discriminator_forward.1} parent=1 // pred_check_branch
      %39 = sbr.rel (0) target = $region21
    $region20: #{discriminator_forward.1} parent=1 // pred_region
      _
    $region21: #{discriminator_forward.1} parent=1 // pred_fallthru
      _
    // Predicated region
    $region22: #{discriminator_forward.1} parent=1 // pred_check
      _
    $region23: #{discriminator_forward.1} parent=1 // pred_check_branch
      %41 = sbr.rel (0) target = $region25
    $region24: #{discriminator_forward.1} parent=1 // pred_region
      _
    $region25: #{discriminator_forward.1} parent=1 // pred_fallthru
      _
    // Predicated region
    $region26: #{discriminator_forward.1} parent=1 // pred_check
      _
    $region27: #{discriminator_forward.1} parent=1 // pred_check_branch
      %43 = sbr.rel (0) target = $region29
    $region28: #{discriminator_forward.1} parent=1 // pred_region
      _
    $region29: #{discriminator_forward.1} parent=1 // pred_fallthru
      _
    // Predicated region
    $region30: #{discriminator_forward.1} parent=1 // pred_check
      _
    $region31: #{discriminator_forward.1} parent=1 // pred_check_branch
      %45 = sbr.rel (0) target = $region33
    $region32: #{discriminator_forward.1} parent=1 // pred_region
      _
    $region33: #{discriminator_forward.1} parent=1 // pred_fallthru
      _
    // Predicated region
    $region34: #{discriminator_forward.1} parent=1 // pred_check
      _
    $region35: #{discriminator_forward.1} parent=1 // pred_check_branch
      %47 = sbr.rel (0) target = $region37
    $region36: #{discriminator_forward.1} parent=1 // pred_region
      _
    $region37: #{discriminator_forward.1} parent=1 // pred_fallthru
      _
    // Predicated region
    $region38: #{discriminator_forward.1} parent=1 // pred_check
      _
    $region39: #{discriminator_forward.1} parent=1 // pred_check_branch
      %49 = sbr.rel (0) target = $region41
    $region40: #{discriminator_forward.1} parent=1 // pred_region
      _
    $region41: #{discriminator_forward.1} parent=1 // pred_fallthru
      _
    // Predicated region
    $region42: #{discriminator_forward.1} parent=1 // pred_check
      _
    $region43: #{discriminator_forward.1} parent=1 // pred_check_branch
      %51 = sbr.rel (0) target = $region45
    $region44: #{discriminator_forward.1} parent=1 // pred_region
      _
    $region45: #{discriminator_forward.1} parent=1 // pred_fallthru
      _
    // Predicated region
    $region46: #{discriminator_forward.1} parent=1 // pred_check
      _
    $region47: #{discriminator_forward.1} parent=1 // pred_check_branch
      %53 = sbr.rel (0) target = $region49
    $region48: #{discriminator_forward.1} parent=1 // pred_region
      %54 = dma.done [#allocation4], 12544
    $region49: #{discriminator_forward.1} parent=1 // pred_fallthru
      _
    %v55 = vld [vmem:[%s0] sm:$0xff]
    %v56 = vld [vmem:[%s0 + $0x8] sm:$0xff]
    %v57 = vld [vmem:[%s0 + $0x10] sm:$0xff]
    %v58 = vld [vmem:[%s0 + $0x18] sm:$0xff]
    %v59 = vld [vmem:[%s1] sm:$0xff]
    %v60 = vld [vmem:[#allocation3] sm:$0xff]
    %v61 = vld [vmem:[#allocation3 + $0x8] sm:$0xff]
    %v62 = vld [vmem:[#allocation3 + $0x10] sm:$0xff]
    %v63 = vld [vmem:[#allocation3 + $0x18] sm:$0xff]
    %v64 = vld [vmem:[#allocation3 + $0x20] sm:$0xff]
    %v65 = vld [vmem:[#allocation3 + $0x28] sm:$0xff]
    %v66 = vld [vmem:[#allocation3 + $0x30] sm:$0xff]
    %v67 = vld [vmem:[#allocation3 + $0x38] sm:$0xff]
    %v68 = vld [vmem:[#allocation3 + $0x40] sm:$0xff]
    %v69 = vld [vmem:[#allocation3 + $0x48] sm:$0xff]
    %v70 = vld [vmem:[#allocation3 + $0x50] sm:$0xff]
    %v71 = vld [vmem:[#allocation3 + $0x58] sm:$0xff]
    %v72 = vld [vmem:[#allocation3 + $0x60] sm:$0xff]
    %v73 = vld [vmem:[#allocation3 + $0x68] sm:$0xff]
    %v74 = vld [vmem:[#allocation3 + $0x70] sm:$0xff]
    %v75 = vld [vmem:[#allocation3 + $0x78] sm:$0xff]
    %v76 = vld [vmem:[#allocation3 + $0x80] sm:$0xff]
    %v77 = vld [vmem:[#allocation3 + $0x88] sm:$0xff]
    %v78 = vld [vmem:[#allocation3 + $0x90] sm:$0xff]
    %v79 = vld [vmem:[#allocation3 + $0x98] sm:$0xff]
    %v80 = vld [vmem:[#allocation3 + $0xa0] sm:$0xff]
    %v81 = vld [vmem:[#allocation3 + $0xa8] sm:$0xff]
    %v82 = vld [vmem:[#allocation3 + $0xb0] sm:$0xff]
    %v83 = vld [vmem:[#allocation3 + $0xb8] sm:$0xff]
    %v84 = vld [vmem:[#allocation3 + $0xc0] sm:$0xff]
    %v85 = vld [vmem:[#allocation3 + $0xc8] sm:$0xff]
    %v86 = vld [vmem:[#allocation3 + $0xd0] sm:$0xff]
    %v87 = vld [vmem:[#allocation3 + $0xd8] sm:$0xff]
    %v88 = vld [vmem:[#allocation3 + $0xe0] sm:$0xff]
    %v89 = vld [vmem:[#allocation3 + $0xe8] sm:$0xff]
    %v90 = vld [vmem:[#allocation3 + $0xf0] sm:$0xff]
    %v91 = vld [vmem:[#allocation3 + $0xf8] sm:$0xff]
    %v92 = vld [vmem:[#allocation3 + $0x100] sm:$0xff]
    %v93 = vld [vmem:[#allocation3 + $0x108] sm:$0xff]
    %v94 = vld [vmem:[#allocation3 + $0x110] sm:$0xff]
    %v95 = vld [vmem:[#allocation3 + $0x118] sm:$0xff]
    %v96 = vld [vmem:[#allocation3 + $0x120] sm:$0xff]
    %v97 = vld [vmem:[#allocation3 + $0x128] sm:$0xff]
    %v98 = vld [vmem:[#allocation3 + $0x130] sm:$0xff]
    %v99 = vld [vmem:[#allocation3 + $0x138] sm:$0xff]
    %v100 = vld [vmem:[#allocation3 + $0x140] sm:$0xff]
    %v101 = vld [vmem:[#allocation3 + $0x148] sm:$0xff]
    %v102 = vld [vmem:[#allocation3 + $0x150] sm:$0xff]
    %v103 = vld [vmem:[#allocation3 + $0x158] sm:$0xff]
    %v104 = vld [vmem:[#allocation3 + $0x160] sm:$0xff]
    %v105 = vld [vmem:[#allocation3 + $0x168] sm:$0xff]
    %v106 = vld [vmem:[#allocation3 + $0x170] sm:$0xff]
    %v107 = vld [vmem:[#allocation3 + $0x178] sm:$0xff]
    %v108 = vld [vmem:[#allocation3 + $0x180] sm:$0xff]
    %v109 = vld [vmem:[#allocation3 + $0x188] sm:$0xff]
    %v110 = vld [vmem:[#allocation3 + $0x190] sm:$0xff]
    %v111 = vld [vmem:[#allocation3 + $0x198] sm:$0xff]
    %v112 = vld [vmem:[#allocation3 + $0x1a0] sm:$0xff]
    %v113 = vld [vmem:[#allocation3 + $0x1a8] sm:$0xff]
    %v114 = vld [vmem:[#allocation3 + $0x1b0] sm:$0xff]
    %v115 = vld [vmem:[#allocation3 + $0x1b8] sm:$0xff]
    %v116 = vld [vmem:[#allocation3 + $0x1c0] sm:$0xff]
    %v117 = vld [vmem:[#allocation3 + $0x1c8] sm:$0xff]
    %v118 = vld [vmem:[#allocation3 + $0x1d0] sm:$0xff]
    %v119 = vld [vmem:[#allocation3 + $0x1d8] sm:$0xff]
    %v120 = vld [vmem:[#allocation3 + $0x1e0] sm:$0xff]
    %v121 = vld [vmem:[#allocation3 + $0x1e8] sm:$0xff]
    %v122 = vld [vmem:[#allocation3 + $0x1f0] sm:$0xff]
    %v123 = vld [vmem:[#allocation3 + $0x1f8] sm:$0xff]
    %v124 = vld [vmem:[#allocation3 + $0x200] sm:$0xff]
    %v125 = vld [vmem:[#allocation3 + $0x208] sm:$0xff]
    %v126 = vld [vmem:[#allocation3 + $0x210] sm:$0xff]
    %v127 = vld [vmem:[#allocation3 + $0x218] sm:$0xff]
    %v128 = vld [vmem:[#allocation3 + $0x220] sm:$0xff]
    %v129 = vld [vmem:[#allocation3 + $0x228] sm:$0xff]
    %v130 = vld [vmem:[#allocation3 + $0x230] sm:$0xff]
    %v131 = vld [vmem:[#allocation3 + $0x238] sm:$0xff]
    %v132 = vld [vmem:[#allocation3 + $0x240] sm:$0xff]
    %v133 = vld [vmem:[#allocation3 + $0x248] sm:$0xff]
    %v134 = vld [vmem:[#allocation3 + $0x250] sm:$0xff]
    %v135 = vld [vmem:[#allocation3 + $0x258] sm:$0xff]
    %v136 = vld [vmem:[#allocation3 + $0x260] sm:$0xff]
    %v137 = vld [vmem:[#allocation3 + $0x268] sm:$0xff]
    %v138 = vld [vmem:[#allocation3 + $0x270] sm:$0xff]
    %v139 = vld [vmem:[#allocation3 + $0x278] sm:$0xff]
    %v140 = vld [vmem:[#allocation3 + $0x280] sm:$0xff]
    %v141 = vld [vmem:[#allocation3 + $0x288] sm:$0xff]
    %v142 = vld [vmem:[#allocation3 + $0x290] sm:$0xff]
    %v143 = vld [vmem:[#allocation3 + $0x298] sm:$0xff]
    %v144 = vld [vmem:[#allocation3 + $0x2a0] sm:$0xff]
    %v145 = vld [vmem:[#allocation3 + $0x2a8] sm:$0xff]
    %v146 = vld [vmem:[#allocation3 + $0x2b0] sm:$0xff]
    %v147 = vld [vmem:[#allocation3 + $0x2b8] sm:$0xff]
    %v148 = vld [vmem:[#allocation3 + $0x2c0] sm:$0xff]
    %v149 = vld [vmem:[#allocation3 + $0x2c8] sm:$0xff]
    %v150 = vld [vmem:[#allocation3 + $0x2d0] sm:$0xff]
    %v151 = vld [vmem:[#allocation3 + $0x2d8] sm:$0xff]
    %v152 = vld [vmem:[#allocation3 + $0x2e0] sm:$0xff]
    %v153 = vld [vmem:[#allocation3 + $0x2e8] sm:$0xff]
    %v154 = vld [vmem:[#allocation3 + $0x2f0] sm:$0xff]
    %v155 = vld [vmem:[#allocation3 + $0x2f8] sm:$0xff]
    %v156 = vld [vmem:[#allocation3 + $0x300] sm:$0xff]
    %v157 = vld [vmem:[#allocation3 + $0x308] sm:$0xff]
    %v158 = vld [vmem:[%s3] sm:$0x3]
    %v160 = vlaneseq
    %v161 = vshrl.u32 %v160, 7
    %v162 = vsub.s32 0, %v161
    %v163 = vrot.slane %v158, %v162
    %v164 = vlaneseq
    %v165 = vshrl.u32 %v164, 7
    %v166 = vsub.s32 1, %v165
    %v167 = vrot.slane %v158, %v166
    %vm170 = vcmask 64512
    %v172 = vsel %vm170, %v58, 0
    %174 = vmatprep.subr.mxu0 %v61
    %175 = vmatpush1.msra.mxu0 %v60
    %176 = vmatprep.subr.mxu0 %v63
    %177 = vmatpush1.msra.mxu0 %v62
    %178 = vmatprep.subr.mxu0 %v65
    %179 = vmatpush1.msra.mxu0 %v64
    %180 = vmatprep.subr.mxu0 %v67
    %181 = vmatpush1.msra.mxu0 %v66
    %182 = vmatprep.subr.mxu0 %v69
    %183 = vmatpush1.msra.mxu0 %v68
    %184 = vmatprep.subr.mxu0 %v71
    %185 = vmatpush1.msra.mxu0 %v70
    %186 = vmatprep.subr.mxu0 %v73
    %187 = vmatpush1.msra.mxu0 %v72
    %188 = vmatprep.subr.mxu0 %v75
    %189 = vmatpush1.msra.mxu0 %v74
    %190 = vmatprep.subr.mxu0 %v77
    %191 = vmatpush1.msra.mxu0 %v76
    %192 = vmatprep.subr.mxu0 %v79
    %193 = vmatpush1.msra.mxu0 %v78
    %194 = vmatprep.subr.mxu0 %v81
    %195 = vmatpush1.msra.mxu0 %v80
    %196 = vmatprep.subr.mxu0 %v83
    %197 = vmatpush1.msra.mxu0 %v82
    %198 = vmatprep.subr.mxu0 %v85
    %199 = vmatpush1.msra.mxu0 %v84
    %200 = vmatprep.subr.mxu0 %v87
    %201 = vmatpush1.msra.mxu0 %v86
    %202 = vmatprep.subr.mxu0 %v89
    %203 = vmatpush1.msra.mxu0 %v88
    %204 = vmatprep.subr.mxu0 %v91
    %205 = vmatpush1.msra.mxu0 %v90
    %206 = vmatprep.subr.mxu0 %v93
    %207 = vmatpush1.msra.mxu0 %v92
    %208 = vmatprep.subr.mxu0 %v95
    %209 = vmatpush1.msra.mxu0 %v94
    %210 = vmatprep.subr.mxu0 %v97
    %211 = vmatpush1.msra.mxu0 %v96
    %212 = vmatprep.subr.mxu0 %v99
    %213 = vmatpush1.msra.mxu0 %v98
    %214 = vmatprep.subr.mxu0 %v101
    %215 = vmatpush1.msra.mxu0 %v100
    %216 = vmatprep.subr.mxu0 %v103
    %217 = vmatpush1.msra.mxu0 %v102
    %218 = vmatprep.subr.mxu0 %v105
    %219 = vmatpush1.msra.mxu0 %v104
    %220 = vmatprep.subr.mxu0 %v107
    %221 = vmatpush1.msra.mxu0 %v106
    %222 = vmatprep.subr.mxu0 %v109
    %223 = vmatpush1.msra.mxu0 %v108
    %224 = vmatprep.subr.mxu0 %v111
    %225 = vmatpush1.msra.mxu0 %v110
    %226 = vmatprep.subr.mxu0 %v113
    %227 = vmatpush1.msra.mxu0 %v112
    %228 = vmatprep.subr.mxu0 %v115
    %229 = vmatpush1.msra.mxu0 %v114
    %230 = vmatprep.subr.mxu0 %v117
    %231 = vmatpush1.msra.mxu0 %v116
    %232 = vmatprep.subr.mxu0 %v119
    %233 = vmatpush1.msra.mxu0 %v118
    %234 = vmatprep.subr.mxu0 %v121
    %235 = vmatpush1.msra.mxu0 %v120
    %236 = vmatprep.subr.mxu0 %v123
    %237 = vmatpush1.msra.mxu0 %v122
    %238 = vmatprep.mubr.f32.mxu0 %v56
    %239 = vmatmul.mubr.f32.gmra.mrb[0].mxu0 %v55
    %v240 = vpop.f32.mrb[0].mxu0
    %v241 = vadd.f32 %v163, %v240
    %v242 = vpop.f32.mrb[0].mxu0
    %v243 = vadd.f32 %v167, %v242
    %244 = vdwg.mxu0
    %245 = vmatprep.subr.mxu0 %v125
    %246 = vmatpush1.msra.mxu0 %v124
    %247 = vmatprep.subr.mxu0 %v127
    %248 = vmatpush1.msra.mxu0 %v126
    %249 = vmatprep.subr.mxu0 %v129
    %250 = vmatpush1.msra.mxu0 %v128
    %251 = vmatprep.subr.mxu0 %v131
    %252 = vmatpush1.msra.mxu0 %v130
    %253 = vmatprep.subr.mxu0 %v133
    %254 = vmatpush1.msra.mxu0 %v132
    %255 = vmatprep.subr.mxu0 %v135
    %256 = vmatpush1.msra.mxu0 %v134
    %257 = vmatprep.subr.mxu0 %v137
    %258 = vmatpush1.msra.mxu0 %v136
    %259 = vmatprep.subr.mxu0 %v139
    %260 = vmatpush1.msra.mxu0 %v138
    %261 = vmatprep.subr.mxu0 %v141
    %262 = vmatpush1.msra.mxu0 %v140
    %263 = vmatprep.subr.mxu0 %v143
    %264 = vmatpush1.msra.mxu0 %v142
    %265 = vmatprep.subr.mxu0 %v145
    %266 = vmatpush1.msra.mxu0 %v144
    %267 = vmatprep.subr.mxu0 %v147
    %268 = vmatpush1.msra.mxu0 %v146
    %269 = vmatprep.subr.mxu0 %v149
    %270 = vmatpush1.msra.mxu0 %v148
    %271 = vmatprep.subr.mxu0 %v151
    %272 = vmatpush1.msra.mxu0 %v150
    %273 = vmatprep.subr.mxu0 %v153
    %274 = vmatpush1.msra.mxu0 %v152
    %275 = vmatprep.subr.mxu0 %v155
    %276 = vmatpush1.msra.mxu0 %v154
    %277 = vmatprep.subr.mxu0 %v157
    %278 = vmatpush1.msra.mxu0 %v156
    %279 = vmatprep.subr.mxu0 0.0
    %280 = vmatpush1.msra.mxu0 0.0
    %281 = vmatprep.subr.mxu0 0.0
    %282 = vmatpush1.msra.mxu0 0.0
    %283 = vmatprep.subr.mxu0 0.0
    %284 = vmatpush1.msra.mxu0 0.0
    %285 = vmatprep.subr.mxu0 0.0
    %286 = vmatpush1.msra.mxu0 0.0
    %287 = vmatprep.subr.mxu0 0.0
    %288 = vmatpush1.msra.mxu0 0.0
    %289 = vmatprep.subr.mxu0 0.0
    %290 = vmatpush1.msra.mxu0 0.0
    %291 = vmatprep.subr.mxu0 0.0
    %292 = vmatpush1.msra.mxu0 0.0
    %293 = vmatprep.subr.mxu0 0.0
    %294 = vmatpush1.msra.mxu0 0.0
    %295 = vmatprep.subr.mxu0 0.0
    %296 = vmatpush1.msra.mxu0 0.0
    %297 = vmatprep.subr.mxu0 0.0
    %298 = vmatpush1.msra.mxu0 0.0
    %299 = vmatprep.subr.mxu0 0.0
    %300 = vmatpush1.msra.mxu0 0.0
    %301 = vmatprep.subr.mxu0 0.0
    %302 = vmatpush1.msra.mxu0 0.0
    %303 = vmatprep.subr.mxu0 0.0
    %304 = vmatpush1.msra.mxu0 0.0
    %305 = vmatprep.subr.mxu0 0.0
    %306 = vmatpush1.msra.mxu0 0.0
    %307 = vmatprep.subr.mxu0 0.0
    %308 = vmatpush1.msra.mxu0 0.0
    %309 = vmatprep.mubr.f32.mxu0 %v172
    %310 = vmatmul.mubr.f32.gmra.mrb[0].mxu0 %v57
    %v311 = vpop.f32.mrb[0].mxu0
    %v312 = vadd.f32 %v241, %v311
    %v313 = vpop.f32.mrb[0].mxu0
    %v314 = vadd.f32 %v243, %v313
    %315 = vdwg.mxu0
    %v316 = vld [vmem:[%s4] sm:$0xff]
    %v317 = vld [vmem:[%s4 + $0x8] sm:$0x1]
    %v318 = vld [vmem:[%s5] sm:$0x1]
    %v320 = vlaneseq
    %v321 = vshrl.u32 %v320, 7
    %v322 = vsub.s32 0, %v321
    %v323 = vrot.slane %v318, %v322
    %vm325 = vcmask 72704
    %v327 = vsel %vm325, %v59, 0
    %vm329 = vcmask 1040384
    %v331 = vsel %vm329, %v317, 0
    %333 = vmatprep.subr.mxu0 0.0
    %334 = vmatpush1.msra.mxu0 %v316
    %335 = vmatprep.subr.mxu0 0.0
    %336 = vmatpush1.msra.mxu0 %v331
    %337 = vmatprep.subr.mxu0 0.0
    %338 = vmatpush1.msra.mxu0 0.0
    %339 = vmatprep.subr.mxu0 0.0
    %340 = vmatpush1.msra.mxu0 0.0
    %341 = vmatprep.subr.mxu0 0.0
    %342 = vmatpush1.msra.mxu0 0.0
    %343 = vmatprep.subr.mxu0 0.0
    %344 = vmatpush1.msra.mxu0 0.0
    %345 = vmatprep.subr.mxu0 0.0
    %346 = vmatpush1.msra.mxu0 0.0
    %347 = vmatprep.subr.mxu0 0.0
    %348 = vmatpush1.msra.mxu0 0.0
    %349 = vmatprep.subr.mxu0 0.0
    %350 = vmatpush1.msra.mxu0 0.0
    %351 = vmatprep.subr.mxu0 0.0
    %352 = vmatpush1.msra.mxu0 0.0
    %353 = vmatprep.subr.mxu0 0.0
    %354 = vmatpush1.msra.mxu0 0.0
    %355 = vmatprep.subr.mxu0 0.0
    %356 = vmatpush1.msra.mxu0 0.0
    %357 = vmatprep.subr.mxu0 0.0
    %358 = vmatpush1.msra.mxu0 0.0
    %359 = vmatprep.subr.mxu0 0.0
    %360 = vmatpush1.msra.mxu0 0.0
    %361 = vmatprep.subr.mxu0 0.0
    %362 = vmatpush1.msra.mxu0 0.0
    %363 = vmatprep.subr.mxu0 0.0
    %364 = vmatpush1.msra.mxu0 0.0
    %365 = vmatprep.subr.mxu0 0.0
    %366 = vmatpush1.msra.mxu0 0.0
    %367 = vmatprep.subr.mxu0 0.0
    %368 = vmatpush1.msra.mxu0 0.0
    %369 = vmatprep.subr.mxu0 0.0
    %370 = vmatpush1.msra.mxu0 0.0
    %371 = vmatprep.subr.mxu0 0.0
    %372 = vmatpush1.msra.mxu0 0.0
    %373 = vmatprep.subr.mxu0 0.0
    %374 = vmatpush1.msra.mxu0 0.0
    %375 = vmatprep.subr.mxu0 0.0
    %376 = vmatpush1.msra.mxu0 0.0
    %377 = vmatprep.subr.mxu0 0.0
    %378 = vmatpush1.msra.mxu0 0.0
    %379 = vmatprep.subr.mxu0 0.0
    %380 = vmatpush1.msra.mxu0 0.0
    %381 = vmatprep.subr.mxu0 0.0
    %382 = vmatpush1.msra.mxu0 0.0
    %383 = vmatprep.subr.mxu0 0.0
    %384 = vmatpush1.msra.mxu0 0.0
    %385 = vmatprep.subr.mxu0 0.0
    %386 = vmatpush1.msra.mxu0 0.0
    %387 = vmatprep.subr.mxu0 0.0
    %388 = vmatpush1.msra.mxu0 0.0
    %389 = vmatprep.subr.mxu0 0.0
    %390 = vmatpush1.msra.mxu0 0.0
    %391 = vmatprep.subr.mxu0 0.0
    %392 = vmatpush1.msra.mxu0 0.0
    %393 = vmatprep.subr.mxu0 0.0
    %394 = vmatpush1.msra.mxu0 0.0
    %395 = vmatprep.subr.mxu0 0.0
    %396 = vmatpush1.msra.mxu0 0.0
    %397 = vmatprep.mubr.f32.mxu0 0.0
    %398 = vmatmul.mubr.f32.gmra.mrb[0].mxu0 %v327
    %v399 = vpop.f32.mrb[0].mxu0
    %v400 = vadd.f32 %v323, %v399
    %v401 = vpop.f32.mrb[0].mxu0
    %402 = vdwg.mxu0
    %v403 = vmax.f32 %v312, 0.0
    %v404 = vmax.f32 %v314, 0.0
    %v405 = vmax.f32 %v400, 0.0
    %v406 = vld [vmem:[%s6] sm:$0xff]
    %v407 = vld [vmem:[%s6 + $0x8] sm:$0xff]
    %v408 = vld [vmem:[%s6 + $0x10] sm:$0xff]
    %v409 = vld [vmem:[%s6 + $0x18] sm:$0xff]
    %v410 = vld [vmem:[%s6 + $0x20] sm:$0xff]
    %v411 = vld [vmem:[%s6 + $0x28] sm:$0xff]
    %v412 = vld [vmem:[%s6 + $0x30] sm:$0xff]
    %v413 = vld [vmem:[%s6 + $0x38] sm:$0xff]
    %v414 = vld [vmem:[%s6 + $0x40] sm:$0xff]
    %v415 = vld [vmem:[%s6 + $0x48] sm:$0xff]
    %v416 = vld [vmem:[%s6 + $0x50] sm:$0xff]
    %v417 = vld [vmem:[%s6 + $0x58] sm:$0xff]
    %v418 = vld [vmem:[%s6 + $0x60] sm:$0xff]
    %v419 = vld [vmem:[%s6 + $0x68] sm:$0xff]
    %v420 = vld [vmem:[%s6 + $0x70] sm:$0xff]
    %v421 = vld [vmem:[%s6 + $0x78] sm:$0xff]
    %v422 = vld [vmem:[%s6 + $0x80] sm:$0xff]
    %v423 = vld [vmem:[%s6 + $0x88] sm:$0xff]
    %v424 = vld [vmem:[%s6 + $0x90] sm:$0xff]
    %v425 = vld [vmem:[%s6 + $0x98] sm:$0xff]
    %v426 = vld [vmem:[%s6 + $0xa0] sm:$0xff]
    %v427 = vld [vmem:[%s6 + $0xa8] sm:$0xff]
    %v428 = vld [vmem:[%s6 + $0xb0] sm:$0xff]
    %v429 = vld [vmem:[%s6 + $0xb8] sm:$0xff]
    %v430 = vld [vmem:[%s6 + $0xc0] sm:$0xf]
    %v431 = vld [vmem:[%s7] sm:$0xff]
    %v433 = vsel %vm170, %v405, 0
    %435 = vmatprep.subr.mxu0 0.0
    %436 = vmatpush1.msra.mxu0 %v431
    %437 = vmatprep.subr.mxu0 0.0
    %438 = vmatpush1.msra.mxu0 0.0
    %439 = vmatprep.subr.mxu0 0.0
    %440 = vmatpush1.msra.mxu0 0.0
    %441 = vmatprep.subr.mxu0 0.0
    %442 = vmatpush1.msra.mxu0 0.0
    %443 = vmatprep.subr.mxu0 0.0
    %444 = vmatpush1.msra.mxu0 0.0
    %445 = vmatprep.subr.mxu0 0.0
    %446 = vmatpush1.msra.mxu0 0.0
    %447 = vmatprep.subr.mxu0 0.0
    %448 = vmatpush1.msra.mxu0 0.0
    %449 = vmatprep.subr.mxu0 0.0
    %450 = vmatpush1.msra.mxu0 0.0
    %451 = vmatprep.subr.mxu0 0.0
    %452 = vmatpush1.msra.mxu0 0.0
    %453 = vmatprep.subr.mxu0 0.0
    %454 = vmatpush1.msra.mxu0 0.0
    %455 = vmatprep.subr.mxu0 0.0
    %456 = vmatpush1.msra.mxu0 0.0
    %457 = vmatprep.subr.mxu0 0.0
    %458 = vmatpush1.msra.mxu0 0.0
    %459 = vmatprep.subr.mxu0 0.0
    %460 = vmatpush1.msra.mxu0 0.0
    %461 = vmatprep.subr.mxu0 0.0
    %462 = vmatpush1.msra.mxu0 0.0
    %463 = vmatprep.subr.mxu0 0.0
    %464 = vmatpush1.msra.mxu0 0.0
    %465 = vmatprep.subr.mxu0 0.0
    %466 = vmatpush1.msra.mxu0 0.0
    %467 = vmatprep.subr.mxu0 0.0
    %468 = vmatpush1.msra.mxu0 0.0
    %469 = vmatprep.subr.mxu0 0.0
    %470 = vmatpush1.msra.mxu0 0.0
    %471 = vmatprep.subr.mxu0 0.0
    %472 = vmatpush1.msra.mxu0 0.0
    %473 = vmatprep.subr.mxu0 0.0
    %474 = vmatpush1.msra.mxu0 0.0
    %475 = vmatprep.subr.mxu0 0.0
    %476 = vmatpush1.msra.mxu0 0.0
    %477 = vmatprep.subr.mxu0 0.0
    %478 = vmatpush1.msra.mxu0 0.0
    %479 = vmatprep.subr.mxu0 0.0
    %480 = vmatpush1.msra.mxu0 0.0
    %481 = vmatprep.subr.mxu0 0.0
    %482 = vmatpush1.msra.mxu0 0.0
    %483 = vmatprep.subr.mxu0 0.0
    %484 = vmatpush1.msra.mxu0 0.0
    %485 = vmatprep.subr.mxu0 0.0
    %486 = vmatpush1.msra.mxu0 0.0
    %487 = vmatprep.subr.mxu0 0.0
    %488 = vmatpush1.msra.mxu0 0.0
    %489 = vmatprep.subr.mxu0 0.0
    %490 = vmatpush1.msra.mxu0 0.0
    %491 = vmatprep.subr.mxu0 0.0
    %492 = vmatpush1.msra.mxu0 0.0
    %493 = vmatprep.subr.mxu0 0.0
    %494 = vmatpush1.msra.mxu0 0.0
    %495 = vmatprep.subr.mxu0 0.0
    %496 = vmatpush1.msra.mxu0 0.0
    %497 = vmatprep.subr.mxu0 0.0
    %498 = vmatpush1.msra.mxu0 0.0
    %499 = vmatprep.mubr.f32.mxu0 0.0
    %500 = vmatmul.mubr.f32.gmra.mrb[0].mxu0 %v433
    %v501 = vpop.f32.mrb[0].mxu0
    %v502 = vadd.f32 0.0, %v501
    %v503 = vpop.f32.mrb[0].mxu0
    %504 = vdwg.mxu0
    %vm505 = vcmask 556032
    %v507 = vsel %vm505, %v404, 0
    %vm509 = vcmask 1043456
    %v511 = vsel %vm509, %v430, 0
    %513 = vmatprep.subr.mxu0 0.0
    %514 = vmatpush1.msra.mxu0 %v406
    %515 = vmatprep.subr.mxu0 0.0
    %516 = vmatpush1.msra.mxu0 %v407
    %517 = vmatprep.subr.mxu0 0.0
    %518 = vmatpush1.msra.mxu0 %v408
    %519 = vmatprep.subr.mxu0 0.0
    %520 = vmatpush1.msra.mxu0 %v409
    %521 = vmatprep.subr.mxu0 0.0
    %522 = vmatpush1.msra.mxu0 %v410
    %523 = vmatprep.subr.mxu0 0.0
    %524 = vmatpush1.msra.mxu0 %v411
    %525 = vmatprep.subr.mxu0 0.0
    %526 = vmatpush1.msra.mxu0 %v412
    %527 = vmatprep.subr.mxu0 0.0
    %528 = vmatpush1.msra.mxu0 %v413
    %529 = vmatprep.subr.mxu0 0.0
    %530 = vmatpush1.msra.mxu0 %v414
    %531 = vmatprep.subr.mxu0 0.0
    %532 = vmatpush1.msra.mxu0 %v415
    %533 = vmatprep.subr.mxu0 0.0
    %534 = vmatpush1.msra.mxu0 %v416
    %535 = vmatprep.subr.mxu0 0.0
    %536 = vmatpush1.msra.mxu0 %v417
    %537 = vmatprep.subr.mxu0 0.0
    %538 = vmatpush1.msra.mxu0 %v418
    %539 = vmatprep.subr.mxu0 0.0
    %540 = vmatpush1.msra.mxu0 %v419
    %541 = vmatprep.subr.mxu0 0.0
    %542 = vmatpush1.msra.mxu0 %v420
    %543 = vmatprep.subr.mxu0 0.0
    %544 = vmatpush1.msra.mxu0 %v421
    %545 = vmatprep.subr.mxu0 0.0
    %546 = vmatpush1.msra.mxu0 %v422
    %547 = vmatprep.subr.mxu0 0.0
    %548 = vmatpush1.msra.mxu0 %v423
    %549 = vmatprep.subr.mxu0 0.0
    %550 = vmatpush1.msra.mxu0 %v424
    %551 = vmatprep.subr.mxu0 0.0
    %552 = vmatpush1.msra.mxu0 %v425
    %553 = vmatprep.subr.mxu0 0.0
    %554 = vmatpush1.msra.mxu0 %v426
    %555 = vmatprep.subr.mxu0 0.0
    %556 = vmatpush1.msra.mxu0 %v427
    %557 = vmatprep.subr.mxu0 0.0
    %558 = vmatpush1.msra.mxu0 %v428
    %559 = vmatprep.subr.mxu0 0.0
    %560 = vmatpush1.msra.mxu0 %v429
    %561 = vmatprep.subr.mxu0 0.0
    %562 = vmatpush1.msra.mxu0 %v511
    %563 = vmatprep.subr.mxu0 0.0
    %564 = vmatpush1.msra.mxu0 0.0
    %565 = vmatprep.subr.mxu0 0.0
    %566 = vmatpush1.msra.mxu0 0.0
    %567 = vmatprep.subr.mxu0 0.0
    %568 = vmatpush1.msra.mxu0 0.0
    %569 = vmatprep.subr.mxu0 0.0
    %570 = vmatpush1.msra.mxu0 0.0
    %571 = vmatprep.subr.mxu0 0.0
    %572 = vmatpush1.msra.mxu0 0.0
    %573 = vmatprep.subr.mxu0 0.0
    %574 = vmatpush1.msra.mxu0 0.0
    %575 = vmatprep.subr.mxu0 0.0
    %576 = vmatpush1.msra.mxu0 0.0
    %577 = vmatprep.mubr.f32.mxu0 %v507
    %578 = vmatmul.mubr.f32.gmra.mrb[0].mxu0 %v403
    %v579 = vpop.f32.mrb[0].mxu0
    %v580 = vadd.f32 %v502, %v579
    %v581 = vpop.f32.mrb[0].mxu0
    %582 = vdwg.mxu0
    %v583 = vld [vmem:[%s8] sm:$0x1]
    %v585 = vlaneseq
    %v586 = vshrl.u32 %v585, 7
    %v587 = vsub.s32 0, %v586
    %v588 = vrot.slane %v583, %v587
    %v590 = vadd.f32 %v580, %v588
    %v591 = vmax.f32 %v590, 0.0
    %v592 = vld [vmem:[%s9] sm:$0x1]
    %v594 = vlaneseq
    %v595 = vshrl.u32 %v594, 7
    %v596 = vsub.s32 0, %v595
    %v597 = vrot.slane %v592, %v596
    %v599 = vmul.f32 %v591, %v597
    %vm600 = vcmask 523264
    %v601 = vsel %vm600, %v599, 0.0
    %602 = vadd.xlane.f32.xlu0 %v601
    %v603 = vpop.xlane.xlu0 %602
    %v604 = vld [vmem:[#allocation2] sm:$0x1]
    %v606 = vlaneseq
    %v607 = vshrl.u32 %v606, 7
    %v608 = vsub.s32 0, %v607
    %v609 = vrot.slane %v604, %v608
    %v611 = vadd.f32 %v603, %v609
    %v612 = vxor.u32 %v611, 2147483648
    %v613 = vmul.f32 %v612, 1.442695
    %v614 = vpow.pop %v613
    %v615 = vadd.f32 %v614, 1.0
    %v616 = vrcp.pop %v615
    %v617 = vmul.f32 1.0, %v616
    %v618 = vmax.f32 %v617, 1e-06
    %v619 = vmin.f32 %v618, 0.999999
    %621 = vset.pattern.permute.xlu0 0
    %622 = vperm.xlu0 %621, %v619
    %v623 = vpop.permute.xlu0 %622
    %v624 = vlaneseq
    %v625 = vand.u32 %v624, 127
    %v626 = vlaneseq
    %v627 = vshrl.u32 %v626, 7
    %v628 = vsub.s32 %v625, %v627
    %v629 = vrot.slane %v623, %v628
    %vm631 = vcmask 57344
    %632 = vst.msk [vmem:[#allocation6] sm:$0x1] %vm631, %v629
    // Predicated region
    $region50: #{discriminator_forward.1} parent=1 // pred_check
      _
    $region51: #{discriminator_forward.1} parent=1 // pred_check_branch
      %634 = sbr.rel (0) target = $region53
    $region52: #{discriminator_forward.1} parent=1 // pred_region
      %s636 = ssub.s32 16, 16
      %637 = vsyncadd [#allocation5], %s636
      %s639 = sshll.u32 [#allocation6], 4
      %s640 = int_to_ptr.vmem [resolvable:$true] %s639
      %642 = dma.vmem_to_hbm [thread:$0]  %s640, 16, %s11, [#allocation5]
    $region53: #{discriminator_forward.1} parent=1 // pred_fallthru
      _
    // Predicated region
    $region54: #{discriminator_forward.1} parent=1 // pred_check
      _
    $region55: #{discriminator_forward.1} parent=1 // pred_check_branch
      %644 = sbr.rel (0) target = $region57
    $region56: #{discriminator_forward.1} parent=1 // pred_region
      %645 = dma.done [#allocation5], 16
    $region57: #{discriminator_forward.1} parent=1 // pred_fallthru
      _
    %646 = vsyncpa [#allocation4], 1
    %647 = vsyncpa [#allocation5], 1

</llo_original>
